<compile_context>
chip_gen: v7x
topology: tpu7x:2x2x1
jax: 0.10.0
libtpu: 0.0.40
codegen_flags: <defaults>
</compile_context>

<pallas_src>
import math

import jax
import jax.numpy as jnp
from jax import lax
from jax.experimental import pallas as pl
from jax.experimental.pallas import tpu as pltpu

N_EMBD = 32       # n_embd in the PyTorch module
HEAD_SIZE = 16    # head_size argument
BLOCK_SIZE = 256  # tril buffer size (only the [:T, :T] slice matters)
LANE = 128        # TPU lane width
Q_TILE = 128      # query rows per in-kernel block (causal prefix skipping)


def _head_kernel(x_ref, w_ref, o_ref):
    """Self-attention head for a block of batch elements.

    x_ref : (Bb, T, C)              VMEM  (f32 or bf16)
    w_ref : (C, 3*128)              VMEM  [q*scale | k | v], each padded to 128 lanes
    o_ref : (Bb, T*H//128, 128)     VMEM  lane-dense packing of the (Bb, T, H) output
    """
    Bb, T, C = x_ref.shape
    H = HEAD_SIZE

    x = x_ref[...]
    cdt = x.dtype                      # MXU input dtype (bf16 by default)

    # Fused projection: one (Bb*T, C) @ (C, 384) matmul, f32 accumulation.
    # T % 8 == 0 (asserted in wrapper) -> merging (Bb, T) is a free relayout.
    x2d = x.reshape(Bb * T, C)
    qkv = jnp.dot(x2d, w_ref[...], preferred_element_type=jnp.float32)
    qkv = qkv.reshape(Bb, T, 3 * LANE)

    # 128-aligned slices -> free views (no lane shuffles).
    q = qkv[:, :, 0:LANE]                      # (Bb, T, 128) pre-scaled, zero-padded
    k = qkv[:, :, LANE:2 * LANE]               # (Bb, T, 128) zero-padded
    v = qkv[:, :, 2 * LANE:2 * LANE + H]       # (Bb, T, H), starts on a 128 boundary

    neg = jnp.float32(-1e30)
    tq_full = min(Q_TILE, T)
    n_q = (T + tq_full - 1) // tq_full         # static; at most 2 for T <= 256

    for i in range(n_q):                       # static Python loop (tiny trip count)
        q0 = i * tq_full
        tq = min(tq_full, T - q0)
        kv_end = q0 + tq                       # causal prefix for this q block

        qb = q[:, q0:q0 + tq, :]               # (Bb, tq, 128)
        kb = k[:, :kv_end, :]                  # (Bb, kv_end, 128)
        vb = v[:, :kv_end, :]                  # (Bb, kv_end, H)

        # Scores: contraction over the zero-padded 128 dim is exact (pads are 0).
        wei = jnp.einsum('bqd,bkd->bqk', qb.astype(cdt), kb.astype(cdt),
                         preferred_element_type=jnp.float32)   # (Bb, tq, kv_end)

        # Causal mask from narrow iotas; masked BEFORE the row max (tight numerics).
        qg = lax.broadcasted_iota(jnp.int32, (tq, 1), 0) + q0
        kg = lax.broadcasted_iota(jnp.int32, (1, kv_end), 1)
        wei = jnp.where(kg <= qg, wei, neg)

        # Numerically stable softmax with deferred normalization.
        m = jnp.max(wei, axis=-1, keepdims=True)        # (Bb, tq, 1)
        e = jnp.exp(wei - m)                            # masked entries underflow to 0
        denom = jnp.sum(e, axis=-1, keepdims=True)      # (Bb, tq, 1)

        # Dropout on the attention weights: identity in eval mode.

        out_blk = jnp.einsum('bqk,bkd->bqd', e.astype(cdt), vb.astype(cdt),
                             preferred_element_type=jnp.float32)  # (Bb, tq, H)
        out_blk = out_blk * pl.reciprocal(denom, approx=False)    # EUP, tiny operand

        # Lane-dense store: pack (tq, H) rows into full 128-lane rows.
        r0 = (q0 * H) // LANE
        nr = (tq * H) // LANE
        o_ref[:, r0:r0 + nr, :] = out_blk.reshape(Bb, nr, LANE).astype(o_ref.dtype)


def _device_params():
    """(num_tensorcores, vmem_limit_bytes) for the current TPU generation."""
    kind = ""
    try:
        kind = jax.devices()[0].device_kind.lower()
    except Exception:
        pass
    if "v7" in kind or "7x" in kind:
        # v7x: 64 MiB physical VMEM per TensorCore, 2 TensorCores per chip.
        return 2, 40 * 1024 * 1024
    # v5e / v6e: 128 MiB physical VMEM, 1 TensorCore (default scoped limit is
    # only 16/32 MiB, so we raise it explicitly).
    return 1, 80 * 1024 * 1024


def _pick_block_b(B, T, C, H, x_bytes, n_cores, vmem_budget):
    """Largest divisor of B that fits the VMEM budget; on multi-core chips keep
    at least `n_cores` grid steps so the batch shards across TensorCores."""
    tq = min(Q_TILE, T)
    per_b = (2 * T * C * x_bytes          # x tile (double-buffered)
             + 2 * T * H * 4              # output tile (double-buffered, compact)
             + 4 * T * 3 * LANE           # qkv projection result (f32, padded)
             + 3 * 4 * tq * T)            # live softmax intermediates per q-block
    cap = max(1, int(vmem_budget // per_b))
    target = min(B, cap)
    if n_cores > 1 and B >= n_cores:
        target = min(target, B // n_cores)
    target = max(1, target)
    for bb in range(target, 0, -1):
        if B % bb == 0:
            return bb
    return 1


def head_forward(x, w_key, w_query, w_value, *, use_bf16=True):
    """x: (B, T, C) float32; w_*: (head_size, n_embd) PyTorch-layout (out, in)."""
    B, T, C = x.shape
    H = w_key.shape[0]
    assert C == N_EMBD and H == HEAD_SIZE
    assert T % 8 == 0 and T <= BLOCK_SIZE, "T must be a multiple of 8 and <= block_size"

    scale = 1.0 / math.sqrt(H)

    # Fused (C, 3*128) weight: [q*scale | k | v], each zero-padded to 128 lanes.
    def _pad(w):  # w: (H, C) -> (C, 128)
        return jnp.concatenate(
            [w.T.astype(jnp.float32), jnp.zeros((C, LANE - H), jnp.float32)], axis=1)

    w_fused = jnp.concatenate([_pad(w_query * scale), _pad(w_key), _pad(w_value)], axis=1)

    xin, wf = x, w_fused
    if use_bf16:
        # bf16 MXU inputs with f32 accumulation (all TPU generations); halves the
        # x HBM->VMEM DMA bytes.  The softmax path stays f32.
        xin = x.astype(jnp.bfloat16)
        wf = w_fused.astype(jnp.bfloat16)

    n_cores, vmem_limit = _device_params()
    block_b = _pick_block_b(B, T, C, H, jnp.dtype(xin.dtype).itemsize,
                            n_cores, vmem_limit // 2)
    grid = (B // block_b,)
    out_rows = (T * H) // LANE

    x_spec = pl.BlockSpec((block_b, T, C), lambda b: (b, 0, 0))
    w_spec = pl.BlockSpec((C, 3 * LANE), lambda b: (0, 0))
    o_spec = pl.BlockSpec((block_b, out_rows, LANE), lambda b: (b, 0, 0))

    out_packed = pl.pallas_call(
        _head_kernel,
        out_shape=jax.ShapeDtypeStruct((B, out_rows, LANE), x.dtype),
        grid_spec=pltpu.PrefetchScalarGridSpec(
            num_scalar_prefetch=0,
            grid=grid,
            in_specs=[x_spec, w_spec],
            out_specs=o_spec,
        ),
        compiler_params=pltpu.CompilerParams(
            dimension_semantics=("parallel",),
            vmem_limit_bytes=vmem_limit,
        ),
    )(xin, wf)

    # Unpack the lane-dense layout back to (B, T, H) — a free reshape outside the kernel.
    return out_packed.reshape(B, T, H)


def _reference(x, w_key, w_query, w_value):
    """Pure-JAX reference matching the PyTorch forward (eval mode)."""
    k = x @ w_key.T
    q = x @ w_query.T
    v = x @ w_value.T
    wei = (q @ jnp.swapaxes(k, -2, -1)) * (k.shape[-1] ** -0.5)
    T = x.shape[1]
    mask = jnp.tril(jnp.ones((T, T), dtype=bool))
    wei = jnp.where(mask, wei, -jnp.inf)
    wei = jax.nn.softmax(wei, axis=-1)
    return wei @ v


def _make_inputs(key, B, T, C, H):
    k_x, k_k, k_q, k_v = jax.random.split(key, 4)
    # nn.Linear default init: U(-1/sqrt(in_features), 1/sqrt(in_features)), (out, in).
    bound = 1.0 / math.sqrt(C)
    x = jax.random.normal(k_x, (B, T, C), dtype=jnp.float32)
    w_key = jax.random.uniform(k_k, (H, C), jnp.float32, -bound, bound)
    w_query = jax.random.uniform(k_q, (H, C), jnp.float32, -bound, bound)
    w_value = jax.random.uniform(k_v, (H, C), jnp.float32, -bound, bound)
    return x, w_key, w_query, w_value


if __name__ == "__main__":
    key = jax.random.PRNGKey(0)
    k_small, k_big = jax.random.split(key)

    # Small shape (n_embd=32, head_size=16, short sequence).
    B, T = 2, 8
    x, wk, wq, wv = _make_inputs(k_small, B, T, N_EMBD, HEAD_SIZE)
    out_bf16 = jax.block_until_ready(head_forward(x, wk, wq, wv))            # default bf16 inputs
    out_f32 = jax.block_until_ready(head_forward(x, wk, wq, wv, use_bf16=False))
    ref = _reference(x, wk, wq, wv)
    assert out_bf16.shape == (B, T, HEAD_SIZE)
    assert jnp.allclose(out_f32, ref, atol=2e-3, rtol=2e-3), "f32 path mismatch"
    assert jnp.allclose(out_bf16, ref, atol=2e-2, rtol=2e-2), "bf16 path mismatch"

    # Full block_size sequence: exercises the causal q-block prefix path and
    # the multi-row lane-dense output packing.
    B2, T2 = 4, BLOCK_SIZE
    x2, wk2, wq2, wv2 = _make_inputs(k_big, B2, T2, N_EMBD, HEAD_SIZE)
    out2 = jax.block_until_ready(head_forward(x2, wk2, wq2, wv2))
    ref2 = _reference(x2, wk2, wq2, wv2)
    assert out2.shape == (B2, T2, HEAD_SIZE)
    assert jnp.allclose(out2, ref2, atol=2e-2, rtol=2e-2), "long-seq mismatch"

    print("KERNEL_OK")
</pallas_src>

<mosaic_0001>
module attributes {stable_mosaic.version = 11 : i64} {
  func.func @_head_kernel(%arg0: i32, %arg1: memref<2x8x32xbf16, #tpu.memory_space<vmem>>, %arg2: memref<32x384xbf16, #tpu.memory_space<vmem>>, %arg3: memref<2x1x128xf32, #tpu.memory_space<vmem>>) attributes {dimension_semantics = [#tpu.dimension_semantics<parallel>], iteration_bounds = array<i64: 1>, scalar_prefetch = 0 : i64, scratch_operands = 0 : i64, tpu.core_type = #tpu.core_type<tc>, window_params = [{transform_indices = @transform_0, window_bounds = array<i64: 2, 8, 32>}, {pipeline_mode = #tpu.pipeline_mode<synchronous>, transform_indices = @transform_1, window_bounds = array<i64: 32, 384>}, {transform_indices = @transform_2, window_bounds = array<i64: 2, 1, 128>}]} {
    %c0 = arith.constant 0 : index
    %c0_0 = arith.constant 0 : index
    %c0_1 = arith.constant 0 : index
    %0 = vector.load %arg1[%c0, %c0_0, %c0_1] : memref<2x8x32xbf16, #tpu.memory_space<vmem>>, vector<2x8x32xbf16>
    %1 = vector.shape_cast %0 : vector<2x8x32xbf16> to vector<16x32xbf16>
    %c0_2 = arith.constant 0 : index
    %c0_3 = arith.constant 0 : index
    %2 = vector.load %arg2[%c0_2, %c0_3] : memref<32x384xbf16, #tpu.memory_space<vmem>>, vector<32x384xbf16>
    %cst = arith.constant dense<0.000000e+00> : vector<16x384xf32>
    %3 = tpu.matmul %1, %2, %cst {dimension_numbers = #tpu.dot_dimension_numbers<[1], [0], [0], [1], [0, 0, 1, 1], [], []>} : vector<16x32xbf16>, vector<32x384xbf16>, vector<16x384xf32> -> vector<16x384xf32>
    %4 = vector.shape_cast %3 : vector<16x384xf32> to vector<2x8x384xf32>
    %5 = vector.extract_strided_slice %4 {offsets = [0, 0, 0], sizes = [2, 8, 128], strides = [1, 1, 1]} : vector<2x8x384xf32> to vector<2x8x128xf32>
    %6 = vector.extract_strided_slice %4 {offsets = [0, 0, 128], sizes = [2, 8, 128], strides = [1, 1, 1]} : vector<2x8x384xf32> to vector<2x8x128xf32>
    %7 = vector.extract_strided_slice %4 {offsets = [0, 0, 256], sizes = [2, 8, 16], strides = [1, 1, 1]} : vector<2x8x384xf32> to vector<2x8x16xf32>
    %8 = arith.truncf %5 : vector<2x8x128xf32> to vector<2x8x128xbf16>
    %9 = arith.truncf %6 : vector<2x8x128xf32> to vector<2x8x128xbf16>
    "tpu.trace_start"() <{level = 10 : i32, message = "bqd,bkd->bqk"}> : () -> ()
    %cst_4 = arith.constant dense<0.000000e+00> : vector<2x8x8xf32>
    %10 = tpu.matmul %8, %9, %cst_4 {dimension_numbers = #tpu.dot_dimension_numbers<[2], [2], [1], [1], [0, 0, 0, 1, 1, 1], [0], [0]>} : vector<2x8x128xbf16>, vector<2x8x128xbf16>, vector<2x8x8xf32> -> vector<2x8x8xf32>
    "tpu.trace_stop"() : () -> ()
    %11 = tpu.iota {dimensions = array<i32: 0>} : vector<8x1xi32>
    %c0_i32 = arith.constant 0 : i32
    %12 = vector.broadcast %c0_i32 : i32 to vector<8x1xi32>
    %13 = arith.addi %11, %12 : vector<8x1xi32>
    %14 = tpu.iota {dimensions = array<i32: 1>} : vector<1x8xi32>
    %15 = vector.broadcast %14 : vector<1x8xi32> to vector<8x8xi32>
    %16 = vector.broadcast %13 : vector<8x1xi32> to vector<8x8xi32>
    %17 = arith.cmpi sle, %15, %16 : vector<8x8xi32>
    %cst_5 = arith.constant -1.000000e+30 : f32
    %18 = vector.shape_cast %17 : vector<8x8xi1> to vector<1x8x8xi1>
    %19 = vector.broadcast %18 : vector<1x8x8xi1> to vector<2x8x8xi1>
    %20 = vector.broadcast %cst_5 : f32 to vector<2x8x8xf32>
    %21 = arith.select %19, %10, %20 : vector<2x8x8xi1>, vector<2x8x8xf32>
    %cst_6 = arith.constant dense<0xFF800000> : vector<2x8xf32>
    %22 = vector.multi_reduction <maximumf>, %21, %cst_6 [2] : vector<2x8x8xf32> to vector<2x8xf32>
    %23 = vector.shape_cast %22 : vector<2x8xf32> to vector<2x8x1xf32>
    %24 = vector.broadcast %23 : vector<2x8x1xf32> to vector<2x8x8xf32>
    %25 = arith.subf %21, %24 : vector<2x8x8xf32>
    %26 = math.exp %25 : vector<2x8x8xf32>
    %cst_7 = arith.constant dense<0.000000e+00> : vector<2x8xf32>
    %27 = vector.multi_reduction <add>, %26, %cst_7 [2] : vector<2x8x8xf32> to vector<2x8xf32>
    %28 = vector.shape_cast %27 : vector<2x8xf32> to vector<2x8x1xf32>
    %29 = arith.truncf %26 : vector<2x8x8xf32> to vector<2x8x8xbf16>
    %30 = arith.truncf %7 : vector<2x8x16xf32> to vector<2x8x16xbf16>
    "tpu.trace_start"() <{level = 10 : i32, message = "bqk,bkd->bqd"}> : () -> ()
    %cst_8 = arith.constant dense<0.000000e+00> : vector<2x8x16xf32>
    %31 = tpu.matmul %29, %30, %cst_8 {dimension_numbers = #tpu.dot_dimension_numbers<[2], [1], [1], [2], [0, 0, 0, 1, 1, 2], [0], [0]>} : vector<2x8x8xbf16>, vector<2x8x16xbf16>, vector<2x8x16xf32> -> vector<2x8x16xf32>
    "tpu.trace_stop"() : () -> ()
    %32 = tpu.reciprocal %28 : vector<2x8x1xf32> -> vector<2x8x1xf32>
    %33 = vector.broadcast %32 : vector<2x8x1xf32> to vector<2x8x16xf32>
    %34 = arith.mulf %31, %33 : vector<2x8x16xf32>
    %35 = vector.shape_cast %34 : vector<2x8x16xf32> to vector<2x1x128xf32>
    %c0_9 = arith.constant 0 : index
    %c0_10 = arith.constant 0 : index
    %c0_11 = arith.constant 0 : index
    %36 = vector.load %arg3[%c0_9, %c0_10, %c0_11] : memref<2x1x128xf32, #tpu.memory_space<vmem>>, vector<2x1x128xf32>
    tpu.vector_store %arg3[%c0_9, %c0_10, %c0_11], %35 {strides = array<i32>} : memref<2x1x128xf32, #tpu.memory_space<vmem>>, vector<2x1x128xf32>,
    return
  }
  func.func @transform_0(%arg0: i32) -> (i32, i32, i32) {
    %c0_i32 = arith.constant 0 : i32
    %c0_i32_0 = arith.constant 0 : i32
    %c0_i32_1 = arith.constant 0 : i32
    return %arg0, %c0_i32, %c0_i32_0 : i32, i32, i32
  }
  func.func @transform_1(%arg0: i32) -> (i32, i32) {
    %c0_i32 = arith.constant 0 : i32
    %c0_i32_0 = arith.constant 0 : i32
    %c0_i32_1 = arith.constant 0 : i32
    return %c0_i32, %c0_i32_0 : i32, i32
  }
  func.func @transform_2(%arg0: i32) -> (i32, i32, i32) {
    %c0_i32 = arith.constant 0 : i32
    %c0_i32_0 = arith.constant 0 : i32
    %c0_i32_1 = arith.constant 0 : i32
    return %arg0, %c0_i32, %c0_i32_0 : i32, i32, i32
  }
}

</mosaic_0001>

<llo_original>
// kernel: tpu_custom_call.1
$region0: #{tpu_custom_call.1}
  #allocation0 [shape = 'u32[]', space=smem, size = 0x4, offset = 0x4, fixed_abs, tag = 'smem constant byte address 0x4 - core index']
  #allocation1 [shape = 'u32[144,128]{1,0:T(1,128)}', space=vmem, size = 0x12000, scoped, tag = 'internal scratch']
  %s0 = inlined_call_operand.hbm [shape: bf16[2,8,32], index: 0, kind: input, shape index: {}]
  %s1 = inlined_call_operand.hbm [shape: bf16[32,384], index: 1, kind: input, shape index: {}]
  %s2 = inlined_call_operand.hbm [shape: f32[2,1,128], index: 2, kind: output, shape index: {}]
  %s3 = sld [smem:[#allocation0]]
  $region26: #{tpu_custom_call.1} parent=0
    _
  %s5 = ssub.s32 1, %s3
  %s6 = scalar_select 0, %s5, %s3
  $region1: #{tpu_custom_call.1} parent=0
    #allocation2 [shape = 'u8[4096]{0}', space=vmem, size = 0x1000, scoped, tag = 'input window, operand 0, single buffered']
    #allocation3 [shape = 's32[1]{0}', space=sflag, size = 0x4, scoped, tag = 'scoped memory for tpu_custom_call.1']
    #allocation4 [shape = 's32[1]{0}', space=sflag, size = 0x4, scoped, tag = 'scoped memory for tpu_custom_call.1']
    #allocation5 [shape = 'u8[24576]{0}', space=vmem, size = 0x6000, scoped, tag = 'input window, operand 1, single buffered']
    #allocation6 [shape = 's32[1]{0}', space=sflag, size = 0x4, scoped, tag = 'scoped memory for tpu_custom_call.1']
    #allocation7 [shape = 'u8[1024]{0}', space=vmem, size = 0x400, scoped, tag = 'output window, operand 0, single buffered']
    %7 = vsyncpa [#allocation3], 0
    %8 = vsyncpa [#allocation6], 0
    %9 = vsyncpa [#allocation4], 0
    // Predicated region
    $region2: #{tpu_custom_call.1} parent=1 // pred_check
      _
    $region3: #{tpu_custom_call.1} parent=1 // pred_check_branch
      %11 = sbr.rel (0) target = $region5
    $region4: #{tpu_custom_call.1} parent=1 // pred_region
      %s13 = ssub.s32 128, 128
      %14 = vsyncadd [#allocation3], %s13
      %s15 = sshll.u32 [#allocation2], 4
      %s16 = int_to_ptr.vmem [resolvable:$true] %s15
      %21 = dma.hbm_to_vmem [thread:$0]  %s0, 128, %s16, [#allocation3], 64, 64, 4
    $region5: #{tpu_custom_call.1} parent=1 // pred_fallthru
      _
    // Predicated region
    $region6: #{tpu_custom_call.1} parent=1 // pred_check
      _
    $region7: #{tpu_custom_call.1} parent=1 // pred_check_branch
      %23 = sbr.rel (0) target = $region9
    $region8: #{tpu_custom_call.1} parent=1 // pred_region
      %s25 = ssub.s32 768, 768
      %26 = vsyncadd [#allocation6], %s25
      %s27 = sshll.u32 [#allocation5], 4
      %s28 = int_to_ptr.vmem [resolvable:$true] %s27
      %33 = dma.hbm_to_vmem [thread:$0]  %s1, 768, %s28, [#allocation6], 192, 192, 12
    $region9: #{tpu_custom_call.1} parent=1 // pred_fallthru
      _
    // Predicated region
    $region10: #{tpu_custom_call.1} parent=1 // pred_check
      _
    $region11: #{tpu_custom_call.1} parent=1 // pred_check_branch
      %35 = sbr.rel (0) target = $region13
    $region12: #{tpu_custom_call.1} parent=1 // pred_region
      %36 = dma.done [#allocation3], 128
    $region13: #{tpu_custom_call.1} parent=1 // pred_fallthru
      _
    // Predicated region
    $region14: #{tpu_custom_call.1} parent=1 // pred_check
      _
    $region15: #{tpu_custom_call.1} parent=1 // pred_check_branch
      %38 = sbr.rel (0) target = $region17
    $region16: #{tpu_custom_call.1} parent=1 // pred_region
      %39 = dma.done [#allocation6], 768
    $region17: #{tpu_custom_call.1} parent=1 // pred_fallthru
      _
    %v41 = vld [vmem:[#allocation2] sm:$0xf]
    %v42 = vld [vmem:[#allocation2 + $0x4] sm:$0xf]
    %v43 = vld [vmem:[#allocation5] sm:$0xff]
    %v44 = vld [vmem:[#allocation5 + $0x8] sm:$0xf]
    %v45 = vld [vmem:[#allocation5 + $0xc] sm:$0xff]
    %v46 = vld [vmem:[#allocation5 + $0x14] sm:$0xf]
    %v47 = vld [vmem:[#allocation5 + $0x18] sm:$0xff]
    %v48 = vld [vmem:[#allocation5 + $0x20] sm:$0xf]
    %v49 = vld [vmem:[#allocation5 + $0x24] sm:$0xff]
    %v50 = vld [vmem:[#allocation5 + $0x2c] sm:$0xf]
    %v53 = vunpack.c.l.b16 %v41
    %v54 = vunpack.c.l.b16 %v42
    %v55 = vpack.c.b16 %v54, %v53
    %v64 = vunpack.c.l.b16 %v43
    %v65 = vunpack.c.h.b16 %v43
    %v66 = vunpack.c.l.b16 %v44
    %v67 = vunpack.c.l.b16 %v45
    %v68 = vunpack.c.h.b16 %v45
    %v69 = vunpack.c.l.b16 %v46
    %v70 = vunpack.c.l.b16 %v47
    %v71 = vunpack.c.h.b16 %v47
    %v72 = vunpack.c.l.b16 %v48
    %v73 = vunpack.c.l.b16 %v49
    %v74 = vunpack.c.h.b16 %v49
    %v75 = vunpack.c.l.b16 %v50
    %v76 = vpack.c.b16 %v67, %v64
    %v77 = vpack.c.b16 %v68, %v65
    %v78 = vpack.c.b16 %v69, %v66
    %v79 = vpack.c.b16 %v73, %v70
    %v80 = vpack.c.b16 %v74, %v71
    %v81 = vpack.c.b16 %v75, %v72
    %vm88 = vcmask 261120
    %v90 = vsel %vm88, %v55, 0
    %92 = vmatprep.subr.bf16.mxu0 %v77
    %93 = vmatpush1.bf16.msra.mxu0 %v76
    %94 = vmatprep.subr.bf16.mxu0 %v80
    %95 = vmatpush1.bf16.msra.mxu0 %v79
    %96 = vmatprep.subr.bf16.mxu0 0
    %97 = vmatpush1.bf16.msra.mxu0 0
    %98 = vmatprep.subr.bf16.mxu0 0
    %99 = vmatpush1.bf16.msra.mxu0 0
    %100 = vmatprep.subr.bf16.mxu0 0
    %101 = vmatpush1.bf16.msra.mxu0 0
    %102 = vmatprep.subr.bf16.mxu0 0
    %103 = vmatpush1.bf16.msra.mxu0 0
    %104 = vmatprep.subr.bf16.mxu0 0
    %105 = vmatpush1.bf16.msra.mxu0 0
    %106 = vmatprep.subr.bf16.mxu0 0
    %107 = vmatpush1.bf16.msra.mxu0 0
    %108 = vmatprep.subr.bf16.mxu0 0
    %109 = vmatpush1.bf16.msra.mxu0 0
    %110 = vmatprep.subr.bf16.mxu0 0
    %111 = vmatpush1.bf16.msra.mxu0 0
    %112 = vmatprep.subr.bf16.mxu0 0
    %113 = vmatpush1.bf16.msra.mxu0 0
    %114 = vmatprep.subr.bf16.mxu0 0
    %115 = vmatpush1.bf16.msra.mxu0 0
    %116 = vmatprep.subr.bf16.mxu0 0
    %117 = vmatpush1.bf16.msra.mxu0 0
    %118 = vmatprep.subr.bf16.mxu0 0
    %119 = vmatpush1.bf16.msra.mxu0 0
    %120 = vmatprep.subr.bf16.mxu0 0
    %121 = vmatpush1.bf16.msra.mxu0 0
    %122 = vmatprep.subr.bf16.mxu0 0
    %123 = vmatpush1.bf16.msra.mxu0 0
    %124 = vmatprep.mubr.bf16.mxu0 0
    %125 = vmatmul.mubr.bf16.gmra.mrb[0].mxu0 %v90
    %v126 = vpop.f32.mrb[0].mxu0
    %v127 = vadd.f32 0.0, %v126
    %v128 = vpop.f32.mrb[0].mxu0
    %v129 = vadd.f32 0.0, %v128
    %v130 = vpop.f32.mrb[0].mxu0
    %v131 = vadd.f32 0.0, %v130
    %v132 = vpop.f32.mrb[0].mxu0
    %v133 = vadd.f32 0.0, %v132
    %134 = vdwg.mxu0
    %135 = vmatprep.subr.bf16.mxu0 0
    %136 = vmatpush1.bf16.msra.mxu0 %v78
    %137 = vmatprep.subr.bf16.mxu0 0
    %138 = vmatpush1.bf16.msra.mxu0 %v81
    %139 = vmatprep.subr.bf16.mxu0 0
    %140 = vmatpush1.bf16.msra.mxu0 0
    %141 = vmatprep.subr.bf16.mxu0 0
    %142 = vmatpush1.bf16.msra.mxu0 0
    %143 = vmatprep.subr.bf16.mxu0 0
    %144 = vmatpush1.bf16.msra.mxu0 0
    %145 = vmatprep.subr.bf16.mxu0 0
    %146 = vmatpush1.bf16.msra.mxu0 0
    %147 = vmatprep.subr.bf16.mxu0 0
    %148 = vmatpush1.bf16.msra.mxu0 0
    %149 = vmatprep.subr.bf16.mxu0 0
    %150 = vmatpush1.bf16.msra.mxu0 0
    %151 = vmatprep.subr.bf16.mxu0 0
    %152 = vmatpush1.bf16.msra.mxu0 0
    %153 = vmatprep.subr.bf16.mxu0 0
    %154 = vmatpush1.bf16.msra.mxu0 0
    %155 = vmatprep.subr.bf16.mxu0 0
    %156 = vmatpush1.bf16.msra.mxu0 0
    %157 = vmatprep.subr.bf16.mxu0 0
    %158 = vmatpush1.bf16.msra.mxu0 0
    %159 = vmatprep.subr.bf16.mxu0 0
    %160 = vmatpush1.bf16.msra.mxu0 0
    %161 = vmatprep.subr.bf16.mxu0 0
    %162 = vmatpush1.bf16.msra.mxu0 0
    %163 = vmatprep.subr.bf16.mxu0 0
    %164 = vmatpush1.bf16.msra.mxu0 0
    %165 = vmatprep.subr.bf16.mxu0 0
    %166 = vmatpush1.bf16.msra.mxu0 0
    %167 = vmatprep.mubr.bf16.mxu0 0
    %168 = vmatmul.mubr.bf16.gmra.mrb[0].mxu0 %v90
    %v169 = vpop.f32.mrb[0].mxu0
    %v170 = vadd.f32 0.0, %v169
    %v171 = vpop.f32.mrb[0].mxu0
    %v172 = vpop.f32.mrb[0].mxu0
    %v173 = vadd.f32 0.0, %v172
    %v174 = vpop.f32.mrb[0].mxu0
    %175 = vdwg.mxu0
    %v176 = vpack.c.bf16 %v127, %v127
    %v177 = vpack.c.bf16 %v131, %v131
    %v178 = vpack.c.bf16 %v129, %v129
    %v179 = vpack.c.bf16 %v133, %v133
    %180 = vmatprep.subr.bf16.mxu0 0
    %181 = vmatpush1.bf16.xpose.msra.mxu0 %v178
    %182 = vmatprep.subr.bf16.mxu0 0
    %183 = vmatpush1.bf16.xpose.msra.mxu0 0
    %184 = vmatprep.subr.bf16.mxu0 0
    %185 = vmatpush1.bf16.xpose.msra.mxu0 0
    %186 = vmatprep.subr.bf16.mxu0 0
    %187 = vmatpush1.bf16.xpose.msra.mxu0 0
    %188 = vmatprep.subr.bf16.mxu0 0
    %189 = vmatpush1.bf16.xpose.msra.mxu0 0
    %190 = vmatprep.subr.bf16.mxu0 0
    %191 = vmatpush1.bf16.xpose.msra.mxu0 0
    %192 = vmatprep.subr.bf16.mxu0 0
    %193 = vmatpush1.bf16.xpose.msra.mxu0 0
    %194 = vmatprep.subr.bf16.mxu0 0
    %195 = vmatpush1.bf16.xpose.msra.mxu0 0
    %196 = vmatprep.subr.bf16.mxu0 0
    %197 = vmatpush1.bf16.xpose.msra.mxu0 0
    %198 = vmatprep.subr.bf16.mxu0 0
    %199 = vmatpush1.bf16.xpose.msra.mxu0 0
    %200 = vmatprep.subr.bf16.mxu0 0
    %201 = vmatpush1.bf16.xpose.msra.mxu0 0
    %202 = vmatprep.subr.bf16.mxu0 0
    %203 = vmatpush1.bf16.xpose.msra.mxu0 0
    %204 = vmatprep.subr.bf16.mxu0 0
    %205 = vmatpush1.bf16.xpose.msra.mxu0 0
    %206 = vmatprep.subr.bf16.mxu0 0
    %207 = vmatpush1.bf16.xpose.msra.mxu0 0
    %208 = vmatprep.subr.bf16.mxu0 0
    %209 = vmatpush1.bf16.xpose.msra.mxu0 0
    %210 = vmatprep.subr.bf16.mxu0 0
    %211 = vmatpush1.bf16.xpose.msra.mxu0 0
    %212 = vmatprep.mubr.bf16.mxu0 0
    %213 = vmatmul.mubr.bf16.gmra.mrb[0].mxu0 %v176
    %v214 = vpop.f32.mrb[0].mxu0
    %v215 = vadd.f32 0.0, %v214
    %v216 = vpop.f32.mrb[0].mxu0
    %v217 = vpop.f32.mrb[0].mxu0
    %v218 = vpop.f32.mrb[0].mxu0
    %219 = vdwg.mxu0
    %220 = vmatprep.subr.bf16.mxu0 0
    %221 = vmatpush1.bf16.xpose.msra.mxu0 %v179
    %222 = vmatprep.subr.bf16.mxu0 0
    %223 = vmatpush1.bf16.xpose.msra.mxu0 0
    %224 = vmatprep.subr.bf16.mxu0 0
    %225 = vmatpush1.bf16.xpose.msra.mxu0 0
    %226 = vmatprep.subr.bf16.mxu0 0
    %227 = vmatpush1.bf16.xpose.msra.mxu0 0
    %228 = vmatprep.subr.bf16.mxu0 0
    %229 = vmatpush1.bf16.xpose.msra.mxu0 0
    %230 = vmatprep.subr.bf16.mxu0 0
    %231 = vmatpush1.bf16.xpose.msra.mxu0 0
    %232 = vmatprep.subr.bf16.mxu0 0
    %233 = vmatpush1.bf16.xpose.msra.mxu0 0
    %234 = vmatprep.subr.bf16.mxu0 0
    %235 = vmatpush1.bf16.xpose.msra.mxu0 0
    %236 = vmatprep.subr.bf16.mxu0 0
    %237 = vmatpush1.bf16.xpose.msra.mxu0 0
    %238 = vmatprep.subr.bf16.mxu0 0
    %239 = vmatpush1.bf16.xpose.msra.mxu0 0
    %240 = vmatprep.subr.bf16.mxu0 0
    %241 = vmatpush1.bf16.xpose.msra.mxu0 0
    %242 = vmatprep.subr.bf16.mxu0 0
    %243 = vmatpush1.bf16.xpose.msra.mxu0 0
    %244 = vmatprep.subr.bf16.mxu0 0
    %245 = vmatpush1.bf16.xpose.msra.mxu0 0
    %246 = vmatprep.subr.bf16.mxu0 0
    %247 = vmatpush1.bf16.xpose.msra.mxu0 0
    %248 = vmatprep.subr.bf16.mxu0 0
    %249 = vmatpush1.bf16.xpose.msra.mxu0 0
    %250 = vmatprep.subr.bf16.mxu0 0
    %251 = vmatpush1.bf16.xpose.msra.mxu0 0
    %252 = vmatprep.mubr.bf16.mxu0 0
    %253 = vmatmul.mubr.bf16.gmra.mrb[0].mxu0 %v177
    %v254 = vpop.f32.mrb[0].mxu0
    %v255 = vadd.f32 0.0, %v254
    %v256 = vpop.f32.mrb[0].mxu0
    %v257 = vpop.f32.mrb[0].mxu0
    %v258 = vpop.f32.mrb[0].mxu0
    %259 = vdwg.mxu0
    %v260 = vlaneseq
    %v261 = vshrl.u32 %v260, 7
    %v262 = vlaneseq
    %v263 = vand.u32 %v262, 127
    %vm264 = vcmp.le.s32.totalorder %v263, %v261
    %v265 = vsel %vm264, 1, 0
    %vm266 = vcmp.eq.s32.totalorder %v265, 1
    %v267 = vsel %vm266, %v215, -1e+30
    %v268 = vsel %vm266, %v255, -1e+30
    %vm269 = vcmask 64512
    %v270 = vsel %vm269, %v267, -inf
    %271 = vmax.xlane.f32.xlu0 %v270
    %v272 = vpop.xlane.xlu0 %271
    %v273 = vsel %vm269, %v268, -inf
    %274 = vmax.xlane.f32.xlu0 %v273
    %v275 = vpop.xlane.xlu0 %274
    %v276 = vsub.f32 %v267, %v272
    %v277 = vsub.f32 %v268, %v275
    %v278 = vmul.f32 %v276, 1.442695
    %v279 = vpow.pop %v278
    %v280 = vmul.f32 %v277, 1.442695
    %v281 = vpow.pop %v280
    %v282 = vsel %vm269, %v279, 0.0
    %283 = vadd.xlane.f32.xlu0 %v282
    %v284 = vpop.xlane.xlu0 %283
    %v285 = vsel %vm269, %v281, 0.0
    %286 = vadd.xlane.f32.xlu0 %v285
    %v287 = vpop.xlane.xlu0 %286
    %v288 = vpack.c.bf16 %v279, %v279
    %v289 = vpack.c.bf16 %v281, %v281
    %v290 = vpack.c.bf16 %v170, %v170
    %v291 = vpack.c.bf16 %v173, %v173
    %v293 = vsel %vm269, %v288, 0
    %vm295 = vcmask 1043456
    %v297 = vsel %vm295, %v290, 0
    %299 = vmatprep.subr.bf16.mxu0 0
    %300 = vmatpush1.bf16.msra.mxu0 %v297
    %301 = vmatprep.subr.bf16.mxu0 0
    %302 = vmatpush1.bf16.msra.mxu0 0
    %303 = vmatprep.subr.bf16.mxu0 0
    %304 = vmatpush1.bf16.msra.mxu0 0
    %305 = vmatprep.subr.bf16.mxu0 0
    %306 = vmatpush1.bf16.msra.mxu0 0
    %307 = vmatprep.subr.bf16.mxu0 0
    %308 = vmatpush1.bf16.msra.mxu0 0
    %309 = vmatprep.subr.bf16.mxu0 0
    %310 = vmatpush1.bf16.msra.mxu0 0
    %311 = vmatprep.subr.bf16.mxu0 0
    %312 = vmatpush1.bf16.msra.mxu0 0
    %313 = vmatprep.subr.bf16.mxu0 0
    %314 = vmatpush1.bf16.msra.mxu0 0
    %315 = vmatprep.subr.bf16.mxu0 0
    %316 = vmatpush1.bf16.msra.mxu0 0
    %317 = vmatprep.subr.bf16.mxu0 0
    %318 = vmatpush1.bf16.msra.mxu0 0
    %319 = vmatprep.subr.bf16.mxu0 0
    %320 = vmatpush1.bf16.msra.mxu0 0
    %321 = vmatprep.subr.bf16.mxu0 0
    %322 = vmatpush1.bf16.msra.mxu0 0
    %323 = vmatprep.subr.bf16.mxu0 0
    %324 = vmatpush1.bf16.msra.mxu0 0
    %325 = vmatprep.subr.bf16.mxu0 0
    %326 = vmatpush1.bf16.msra.mxu0 0
    %327 = vmatprep.subr.bf16.mxu0 0
    %328 = vmatpush1.bf16.msra.mxu0 0
    %329 = vmatprep.subr.bf16.mxu0 0
    %330 = vmatpush1.bf16.msra.mxu0 0
    %331 = vmatprep.mubr.bf16.mxu0 0
    %332 = vmatmul.mubr.bf16.gmra.mrb[0].mxu0 %v293
    %v333 = vpop.f32.mrb[0].mxu0
    %v334 = vadd.f32 0.0, %v333
    %v335 = vpop.f32.mrb[0].mxu0
    %v336 = vpop.f32.mrb[0].mxu0
    %v337 = vpop.f32.mrb[0].mxu0
    %338 = vdwg.mxu0
    %v340 = vsel %vm269, %v289, 0
    %v343 = vsel %vm295, %v291, 0
    %345 = vmatprep.subr.bf16.mxu0 0
    %346 = vmatpush1.bf16.msra.mxu0 %v343
    %347 = vmatprep.subr.bf16.mxu0 0
    %348 = vmatpush1.bf16.msra.mxu0 0
    %349 = vmatprep.subr.bf16.mxu0 0
    %350 = vmatpush1.bf16.msra.mxu0 0
    %351 = vmatprep.subr.bf16.mxu0 0
    %352 = vmatpush1.bf16.msra.mxu0 0
    %353 = vmatprep.subr.bf16.mxu0 0
    %354 = vmatpush1.bf16.msra.mxu0 0
    %355 = vmatprep.subr.bf16.mxu0 0
    %356 = vmatpush1.bf16.msra.mxu0 0
    %357 = vmatprep.subr.bf16.mxu0 0
    %358 = vmatpush1.bf16.msra.mxu0 0
    %359 = vmatprep.subr.bf16.mxu0 0
    %360 = vmatpush1.bf16.msra.mxu0 0
    %361 = vmatprep.subr.bf16.mxu0 0
    %362 = vmatpush1.bf16.msra.mxu0 0
    %363 = vmatprep.subr.bf16.mxu0 0
    %364 = vmatpush1.bf16.msra.mxu0 0
    %365 = vmatprep.subr.bf16.mxu0 0
    %366 = vmatpush1.bf16.msra.mxu0 0
    %367 = vmatprep.subr.bf16.mxu0 0
    %368 = vmatpush1.bf16.msra.mxu0 0
    %369 = vmatprep.subr.bf16.mxu0 0
    %370 = vmatpush1.bf16.msra.mxu0 0
    %371 = vmatprep.subr.bf16.mxu0 0
    %372 = vmatpush1.bf16.msra.mxu0 0
    %373 = vmatprep.subr.bf16.mxu0 0
    %374 = vmatpush1.bf16.msra.mxu0 0
    %375 = vmatprep.subr.bf16.mxu0 0
    %376 = vmatpush1.bf16.msra.mxu0 0
    %377 = vmatprep.mubr.bf16.mxu0 0
    %378 = vmatmul.mubr.bf16.gmra.mrb[0].mxu0 %v340
    %v379 = vpop.f32.mrb[0].mxu0
    %v380 = vadd.f32 0.0, %v379
    %v381 = vpop.f32.mrb[0].mxu0
    %v382 = vpop.f32.mrb[0].mxu0
    %v383 = vpop.f32.mrb[0].mxu0
    %384 = vdwg.mxu0
    %v385 = vrcp.pop %v284
    %v386 = vrcp.pop %v287
    %v387 = vmul.f32 %v334, %v385
    %v388 = vmul.f32 %v380, %v386
    %v389 = vcombine.high %v387, 0.0
    %v391 = vunpack.c.l.s4 1983009808
    %v392 = vunpack.c.0.s8 %v391
    %v393 = vlaneseq
    %v394 = vshrl.u32 %v393, 7
    %v395 = vsub.s32 %v392, %v394
    %v396 = vrot.slane %v387, %v395
    %v398 = vunpack.c.l.s4 1983009808
    %v399 = vunpack.c.0.s8 %v398
    %v400 = vlaneseq
    %v401 = vshrl.u32 %v400, 7
    %v402 = vsub.s32 %v399, %v401
    %v403 = vrot.slane %v389, %v402
    %v404 = vcombine.high %v396, 0.0
    %v406 = vunpack.c.l.s4 1934713408
    %v407 = vunpack.c.0.s8 %v406
    %v408 = vlaneseq
    %v409 = vshrl.u32 %v408, 7
    %v410 = vsub.s32 %v407, %v409
    %v411 = vrot.slane %v396, %v410
    %v413 = vunpack.c.l.s4 1934713408
    %v414 = vunpack.c.0.s8 %v413
    %v415 = vlaneseq
    %v416 = vshrl.u32 %v415, 7
    %v417 = vsub.s32 %v414, %v416
    %v418 = vrot.slane %v404, %v417
    %v419 = vcombine.high %v403, 0.0
    %v421 = vunpack.c.l.s4 1934713408
    %v422 = vunpack.c.0.s8 %v421
    %v423 = vlaneseq
    %v424 = vshrl.u32 %v423, 7
    %v425 = vsub.s32 %v422, %v424
    %v426 = vrot.slane %v403, %v425
    %v428 = vunpack.c.l.s4 1934713408
    %v429 = vunpack.c.0.s8 %v428
    %v430 = vlaneseq
    %v431 = vshrl.u32 %v430, 7
    %v432 = vsub.s32 %v429, %v431
    %v433 = vrot.slane %v419, %v432
    %v434 = vcombine.high %v411, 0.0
    %v435 = vcombine.high %v418, 0.0
    %v436 = vcombine.high %v426, 0.0
    %v437 = vcombine.high %v433, 0.0
    %v438 = vcombine.high %v388, 0.0
    %v440 = vunpack.c.l.s4 1983009808
    %v441 = vunpack.c.0.s8 %v440
    %v442 = vlaneseq
    %v443 = vshrl.u32 %v442, 7
    %v444 = vsub.s32 %v441, %v443
    %v445 = vrot.slane %v388, %v444
    %v447 = vunpack.c.l.s4 1983009808
    %v448 = vunpack.c.0.s8 %v447
    %v449 = vlaneseq
    %v450 = vshrl.u32 %v449, 7
    %v451 = vsub.s32 %v448, %v450
    %v452 = vrot.slane %v438, %v451
    %v453 = vcombine.high %v445, 0.0
    %v455 = vunpack.c.l.s4 1934713408
    %v456 = vunpack.c.0.s8 %v455
    %v457 = vlaneseq
    %v458 = vshrl.u32 %v457, 7
    %v459 = vsub.s32 %v456, %v458
    %v460 = vrot.slane %v445, %v459
    %v462 = vunpack.c.l.s4 1934713408
    %v463 = vunpack.c.0.s8 %v462
    %v464 = vlaneseq
    %v465 = vshrl.u32 %v464, 7
    %v466 = vsub.s32 %v463, %v465
    %v467 = vrot.slane %v453, %v466
    %v468 = vcombine.high %v452, 0.0
    %v470 = vunpack.c.l.s4 1934713408
    %v471 = vunpack.c.0.s8 %v470
    %v472 = vlaneseq
    %v473 = vshrl.u32 %v472, 7
    %v474 = vsub.s32 %v471, %v473
    %v475 = vrot.slane %v452, %v474
    %v477 = vunpack.c.l.s4 1934713408
    %v478 = vunpack.c.0.s8 %v477
    %v479 = vlaneseq
    %v480 = vshrl.u32 %v479, 7
    %v481 = vsub.s32 %v478, %v480
    %v482 = vrot.slane %v468, %v481
    %v483 = vcombine.high %v460, 0.0
    %v484 = vcombine.high %v467, 0.0
    %v485 = vcombine.high %v475, 0.0
    %v486 = vcombine.high %v482, 0.0
    %489 = vrot.lane.b32.xlu0 %v434, 16
    %v490 = vpop.permute.xlu0 %489
    %491 = vrot.lane.b32.xlu0 %v483, 16
    %v492 = vpop.permute.xlu0 %491
    %497 = vrot.lane.b32.xlu0 %v418, 32
    %v498 = vpop.permute.xlu0 %497
    %499 = vrot.lane.b32.xlu0 %v467, 32
    %v500 = vpop.permute.xlu0 %499
    %505 = vrot.lane.b32.xlu0 %v435, 48
    %v506 = vpop.permute.xlu0 %505
    %507 = vrot.lane.b32.xlu0 %v484, 48
    %v508 = vpop.permute.xlu0 %507
    %513 = vrot.lane.b32.xlu0 %v426, 64
    %v514 = vpop.permute.xlu0 %513
    %515 = vrot.lane.b32.xlu0 %v475, 64
    %v516 = vpop.permute.xlu0 %515
    %521 = vrot.lane.b32.xlu0 %v436, 80
    %v522 = vpop.permute.xlu0 %521
    %523 = vrot.lane.b32.xlu0 %v485, 80
    %v524 = vpop.permute.xlu0 %523
    %529 = vrot.lane.b32.xlu0 %v433, 96
    %v530 = vpop.permute.xlu0 %529
    %531 = vrot.lane.b32.xlu0 %v482, 96
    %v532 = vpop.permute.xlu0 %531
    %537 = vrot.lane.b32.xlu0 %v437, 112
    %v538 = vpop.permute.xlu0 %537
    %539 = vrot.lane.b32.xlu0 %v486, 112
    %v540 = vpop.permute.xlu0 %539
    %vm543 = vcmask 130048
    %v544 = vsel %vm543, %v411, %v490
    %v545 = vsel %vm543, %v460, %v492
    %v546 = vsel %vm88, %v544, %v498
    %v547 = vsel %vm88, %v545, %v500
    %vm548 = vcmask 392192
    %v549 = vsel %vm548, %v546, %v506
    %v550 = vsel %vm548, %v547, %v508
    %vm551 = vcmask 523264
    %v552 = vsel %vm551, %v549, %v514
    %v553 = vsel %vm551, %v550, %v516
    %vm554 = vcmask 654336
    %v555 = vsel %vm554, %v552, %v522
    %v556 = vsel %vm554, %v553, %v524
    %vm557 = vcmask 785408
    %v558 = vsel %vm557, %v555, %v530
    %v559 = vsel %vm557, %v556, %v532
    %vm560 = vcmask 916480
    %v561 = vsel %vm560, %v558, %v538
    %v562 = vsel %vm560, %v559, %v540
    %563 = vst [vmem:[#allocation7] sm:$0x1] %v561
    %564 = vst [vmem:[#allocation7 + $0x1] sm:$0x1] %v562
    // Predicated region
    $region18: #{tpu_custom_call.1} parent=1 // pred_check
      _
    $region19: #{tpu_custom_call.1} parent=1 // pred_check_branch
      %566 = sbr.rel (0) target = $region21
    $region20: #{tpu_custom_call.1} parent=1 // pred_region
      %s568 = ssub.s32 32, 32
      %569 = vsyncadd [#allocation4], %s568
      %s570 = sshll.u32 [#allocation7], 4
      %s571 = int_to_ptr.vmem [resolvable:$true] %s570
      %576 = dma.vmem_to_hbm [thread:$0]  %s571, 32, %s2, [#allocation4], 16, 16, 1
    $region21: #{tpu_custom_call.1} parent=1 // pred_fallthru
      _
    // Predicated region
    $region22: #{tpu_custom_call.1} parent=1 // pred_check
      _
    $region23: #{tpu_custom_call.1} parent=1 // pred_check_branch
      %578 = sbr.rel (0) target = $region25
    $region24: #{tpu_custom_call.1} parent=1 // pred_region
      %579 = dma.done [#allocation4], 32
    $region25: #{tpu_custom_call.1} parent=1 // pred_fallthru
      _
    %580 = vsyncpa [#allocation3], 1
    %581 = vsyncpa [#allocation6], 1
    %582 = vsyncpa [#allocation4], 1

</llo_original>
